<compile_context>
chip_gen: v5e
topology: v5e:2x2
jax: 0.10.0
libtpu: 0.0.40
codegen_flags: <defaults>
</compile_context>

<pallas_src>
import functools

import jax
import jax.numpy as jnp
from jax.experimental import pallas as pl
from jax.experimental.pallas import tpu as pltpu

WIDTH = 8          # hidden width of the PyTorch module
LANES = 128        # TPU lane count (last dim of the lane-dense slab)
TILE_ROWS = 2048   # 2048 x 128 x 4B = 1 MiB per f32 tile (fits v5e/v6e/v7x)


def _make_kernel(width: int):
    """Kernel over one (tile_rows, 128) slab of inputs.

    x_ref : (tile_rows, 128) f32 VMEM
    w1_ref: (width,) f32 SMEM   -- fc1.weight[:, 0]
    b1_ref: (width,) f32 SMEM   -- fc1.bias
    w2_ref: (width,) f32 SMEM   -- fc2.weight[0, :]
    o_ref : (tile_rows, 128) f32 VMEM
    """

    def kernel(x_ref, w1_ref, b1_ref, w2_ref, o_ref):
        x = x_ref[...]
        # Unrolled over the (tiny) hidden width: per element this is
        # `width` FMAs + `width` tanh (EUP) + `width` FMAs. Purely VPU/EUP,
        # no MXU push/pop; the kernel is HBM-bandwidth bound.
        acc = jnp.tanh(x * w1_ref[0] + b1_ref[0]) * w2_ref[0]
        for j in range(1, width):
            acc = acc + jnp.tanh(x * w1_ref[j] + b1_ref[j]) * w2_ref[j]
        o_ref[...] = acc.astype(o_ref.dtype)

    return kernel


@functools.partial(jax.jit, static_argnames=("tile_rows",))
def two_nn_forward(x, w1, b1, w2, *, tile_rows=TILE_ROWS):
    """x: (N, 1) f32; w1: (width, 1); b1: (width,); w2: (1, width) -> (N, 1)."""
    n = x.shape[0]
    width = w1.shape[0]

    # --- lane-dense reshape: (N, 1) -> (rows_pad, 128) --------------------
    xf = x.reshape(-1).astype(jnp.float32)
    total = xf.shape[0]
    rows = pl.cdiv(total, LANES)
    tr = int(min(tile_rows, rows))           # block rows (== rows if small)
    rows_pad = pl.cdiv(rows, tr) * tr
    pad = rows_pad * LANES - total
    if pad:
        xf = jnp.pad(xf, (0, pad))
    x2 = xf.reshape(rows_pad, LANES)
    grid = (rows_pad // tr,)

    w1f = w1.reshape(-1).astype(jnp.float32)  # (width,)
    b1f = b1.reshape(-1).astype(jnp.float32)  # (width,)
    w2f = w2.reshape(-1).astype(jnp.float32)  # (width,)

    elems = rows_pad * LANES
    cost = pl.CostEstimate(
        flops=4 * width * elems,              # width FMAs for h + width FMAs for acc
        transcendentals=width * elems,        # tanh per hidden unit per element
        bytes_accessed=8 * elems + 3 * width * 4,
    )

    out = pl.pallas_call(
        _make_kernel(width),
        out_shape=jax.ShapeDtypeStruct((rows_pad, LANES), jnp.float32),
        grid_spec=pltpu.PrefetchScalarGridSpec(
            num_scalar_prefetch=0,
            grid=grid,
            in_specs=[
                pl.BlockSpec((tr, LANES), lambda i: (i, 0)),
                pl.BlockSpec(memory_space=pltpu.MemorySpace.SMEM),
                pl.BlockSpec(memory_space=pltpu.MemorySpace.SMEM),
                pl.BlockSpec(memory_space=pltpu.MemorySpace.SMEM),
            ],
            out_specs=pl.BlockSpec((tr, LANES), lambda i: (i, 0)),
        ),
        compiler_params=pltpu.CompilerParams(
            dimension_semantics=("parallel",),
        ),
        cost_estimate=cost,
    )(x2, w1f, b1f, w2f)

    return out.reshape(-1)[:total].reshape(n, 1)


def init_params(key, width):
    # Mimic nn.Linear default init: U(-1/sqrt(fan_in), +1/sqrt(fan_in)).
    k1, k2, k3 = jax.random.split(key, 3)
    bound1 = 1.0 / jnp.sqrt(1.0)              # fc1 fan_in = 1
    w1 = jax.random.uniform(k1, (width, 1), jnp.float32, -bound1, bound1)
    b1 = jax.random.uniform(k2, (width,), jnp.float32, -bound1, bound1)
    bound2 = 1.0 / jnp.sqrt(float(width))     # fc2 fan_in = width
    w2 = jax.random.uniform(k3, (1, width), jnp.float32, -bound2, bound2)
    return w1, b1, w2


def _reference(x, w1, b1, w2):
    return jnp.tanh(x @ w1.T + b1[None, :]) @ w2.T


if __name__ == "__main__":
    key = jax.random.PRNGKey(0)
    kx, kp, kx2 = jax.random.split(key, 3)

    w1, b1, w2 = init_params(kp, WIDTH)

    # Small shape consistent with the module: batch of scalar inputs.
    batch = 8
    x = jax.random.normal(kx, (batch, 1), jnp.float32)
    y = jax.block_until_ready(two_nn_forward(x, w1, b1, w2))
    ref = _reference(x, w1, b1, w2)
    assert y.shape == (batch, 1)
    assert jnp.allclose(y, ref, atol=1e-5, rtol=1e-5)

    # Second check exercising padding + a multi-step grid (tile_rows=8).
    batch2 = 3000
    x2 = jax.random.normal(kx2, (batch2, 1), jnp.float32)
    y2 = jax.block_until_ready(two_nn_forward(x2, w1, b1, w2, tile_rows=8))
    ref2 = _reference(x2, w1, b1, w2)
    assert y2.shape == (batch2, 1)
    assert jnp.allclose(y2, ref2, atol=1e-5, rtol=1e-5)

    print("KERNEL_OK")
</pallas_src>

<mosaic_0001>
module attributes {stable_mosaic.version = 11 : i64} {
  func.func @kernel(%arg0: i32, %arg1: memref<1x128xf32, #tpu.memory_space<vmem>>, %arg2: memref<8xf32, #tpu.memory_space<smem>>, %arg3: memref<8xf32, #tpu.memory_space<smem>>, %arg4: memref<8xf32, #tpu.memory_space<smem>>, %arg5: memref<1x128xf32, #tpu.memory_space<vmem>>) attributes {dimension_semantics = [#tpu.dimension_semantics<parallel>], iteration_bounds = array<i64: 1>, scalar_prefetch = 0 : i64, scratch_operands = 0 : i64, tpu.core_type = #tpu.core_type<tc>, window_params = [{transform_indices = @transform_0, window_bounds = array<i64: 1, 128>}, {transform_indices = @transform_1, window_bounds = array<i64: 8>}, {transform_indices = @transform_2, window_bounds = array<i64: 8>}, {transform_indices = @transform_3, window_bounds = array<i64: 8>}, {transform_indices = @transform_4, window_bounds = array<i64: 1, 128>}]} {
    %c0 = arith.constant 0 : index
    %c0_0 = arith.constant 0 : index
    %0 = vector.load %arg1[%c0, %c0_0] : memref<1x128xf32, #tpu.memory_space<vmem>>, vector<1x128xf32>
    %c0_1 = arith.constant 0 : index
    %1 = memref.load %arg2[%c0_1] : memref<8xf32, #tpu.memory_space<smem>>
    %2 = vector.broadcast %1 : f32 to vector<1x128xf32>
    %3 = arith.mulf %0, %2 : vector<1x128xf32>
    %c0_2 = arith.constant 0 : index
    %4 = memref.load %arg3[%c0_2] : memref<8xf32, #tpu.memory_space<smem>>
    %5 = vector.broadcast %4 : f32 to vector<1x128xf32>
    %6 = arith.addf %3, %5 : vector<1x128xf32>
    %7 = math.tanh %6 : vector<1x128xf32>
    %c0_3 = arith.constant 0 : index
    %8 = memref.load %arg4[%c0_3] : memref<8xf32, #tpu.memory_space<smem>>
    %9 = vector.broadcast %8 : f32 to vector<1x128xf32>
    %10 = arith.mulf %7, %9 : vector<1x128xf32>
    %c1 = arith.constant 1 : index
    %11 = memref.load %arg2[%c1] : memref<8xf32, #tpu.memory_space<smem>>
    %12 = vector.broadcast %11 : f32 to vector<1x128xf32>
    %13 = arith.mulf %0, %12 : vector<1x128xf32>
    %c1_4 = arith.constant 1 : index
    %14 = memref.load %arg3[%c1_4] : memref<8xf32, #tpu.memory_space<smem>>
    %15 = vector.broadcast %14 : f32 to vector<1x128xf32>
    %16 = arith.addf %13, %15 : vector<1x128xf32>
    %17 = math.tanh %16 : vector<1x128xf32>
    %c1_5 = arith.constant 1 : index
    %18 = memref.load %arg4[%c1_5] : memref<8xf32, #tpu.memory_space<smem>>
    %19 = vector.broadcast %18 : f32 to vector<1x128xf32>
    %20 = arith.mulf %17, %19 : vector<1x128xf32>
    %21 = arith.addf %10, %20 : vector<1x128xf32>
    %c2 = arith.constant 2 : index
    %22 = memref.load %arg2[%c2] : memref<8xf32, #tpu.memory_space<smem>>
    %23 = vector.broadcast %22 : f32 to vector<1x128xf32>
    %24 = arith.mulf %0, %23 : vector<1x128xf32>
    %c2_6 = arith.constant 2 : index
    %25 = memref.load %arg3[%c2_6] : memref<8xf32, #tpu.memory_space<smem>>
    %26 = vector.broadcast %25 : f32 to vector<1x128xf32>
    %27 = arith.addf %24, %26 : vector<1x128xf32>
    %28 = math.tanh %27 : vector<1x128xf32>
    %c2_7 = arith.constant 2 : index
    %29 = memref.load %arg4[%c2_7] : memref<8xf32, #tpu.memory_space<smem>>
    %30 = vector.broadcast %29 : f32 to vector<1x128xf32>
    %31 = arith.mulf %28, %30 : vector<1x128xf32>
    %32 = arith.addf %21, %31 : vector<1x128xf32>
    %c3 = arith.constant 3 : index
    %33 = memref.load %arg2[%c3] : memref<8xf32, #tpu.memory_space<smem>>
    %34 = vector.broadcast %33 : f32 to vector<1x128xf32>
    %35 = arith.mulf %0, %34 : vector<1x128xf32>
    %c3_8 = arith.constant 3 : index
    %36 = memref.load %arg3[%c3_8] : memref<8xf32, #tpu.memory_space<smem>>
    %37 = vector.broadcast %36 : f32 to vector<1x128xf32>
    %38 = arith.addf %35, %37 : vector<1x128xf32>
    %39 = math.tanh %38 : vector<1x128xf32>
    %c3_9 = arith.constant 3 : index
    %40 = memref.load %arg4[%c3_9] : memref<8xf32, #tpu.memory_space<smem>>
    %41 = vector.broadcast %40 : f32 to vector<1x128xf32>
    %42 = arith.mulf %39, %41 : vector<1x128xf32>
    %43 = arith.addf %32, %42 : vector<1x128xf32>
    %c4 = arith.constant 4 : index
    %44 = memref.load %arg2[%c4] : memref<8xf32, #tpu.memory_space<smem>>
    %45 = vector.broadcast %44 : f32 to vector<1x128xf32>
    %46 = arith.mulf %0, %45 : vector<1x128xf32>
    %c4_10 = arith.constant 4 : index
    %47 = memref.load %arg3[%c4_10] : memref<8xf32, #tpu.memory_space<smem>>
    %48 = vector.broadcast %47 : f32 to vector<1x128xf32>
    %49 = arith.addf %46, %48 : vector<1x128xf32>
    %50 = math.tanh %49 : vector<1x128xf32>
    %c4_11 = arith.constant 4 : index
    %51 = memref.load %arg4[%c4_11] : memref<8xf32, #tpu.memory_space<smem>>
    %52 = vector.broadcast %51 : f32 to vector<1x128xf32>
    %53 = arith.mulf %50, %52 : vector<1x128xf32>
    %54 = arith.addf %43, %53 : vector<1x128xf32>
    %c5 = arith.constant 5 : index
    %55 = memref.load %arg2[%c5] : memref<8xf32, #tpu.memory_space<smem>>
    %56 = vector.broadcast %55 : f32 to vector<1x128xf32>
    %57 = arith.mulf %0, %56 : vector<1x128xf32>
    %c5_12 = arith.constant 5 : index
    %58 = memref.load %arg3[%c5_12] : memref<8xf32, #tpu.memory_space<smem>>
    %59 = vector.broadcast %58 : f32 to vector<1x128xf32>
    %60 = arith.addf %57, %59 : vector<1x128xf32>
    %61 = math.tanh %60 : vector<1x128xf32>
    %c5_13 = arith.constant 5 : index
    %62 = memref.load %arg4[%c5_13] : memref<8xf32, #tpu.memory_space<smem>>
    %63 = vector.broadcast %62 : f32 to vector<1x128xf32>
    %64 = arith.mulf %61, %63 : vector<1x128xf32>
    %65 = arith.addf %54, %64 : vector<1x128xf32>
    %c6 = arith.constant 6 : index
    %66 = memref.load %arg2[%c6] : memref<8xf32, #tpu.memory_space<smem>>
    %67 = vector.broadcast %66 : f32 to vector<1x128xf32>
    %68 = arith.mulf %0, %67 : vector<1x128xf32>
    %c6_14 = arith.constant 6 : index
    %69 = memref.load %arg3[%c6_14] : memref<8xf32, #tpu.memory_space<smem>>
    %70 = vector.broadcast %69 : f32 to vector<1x128xf32>
    %71 = arith.addf %68, %70 : vector<1x128xf32>
    %72 = math.tanh %71 : vector<1x128xf32>
    %c6_15 = arith.constant 6 : index
    %73 = memref.load %arg4[%c6_15] : memref<8xf32, #tpu.memory_space<smem>>
    %74 = vector.broadcast %73 : f32 to vector<1x128xf32>
    %75 = arith.mulf %72, %74 : vector<1x128xf32>
    %76 = arith.addf %65, %75 : vector<1x128xf32>
    %c7 = arith.constant 7 : index
    %77 = memref.load %arg2[%c7] : memref<8xf32, #tpu.memory_space<smem>>
    %78 = vector.broadcast %77 : f32 to vector<1x128xf32>
    %79 = arith.mulf %0, %78 : vector<1x128xf32>
    %c7_16 = arith.constant 7 : index
    %80 = memref.load %arg3[%c7_16] : memref<8xf32, #tpu.memory_space<smem>>
    %81 = vector.broadcast %80 : f32 to vector<1x128xf32>
    %82 = arith.addf %79, %81 : vector<1x128xf32>
    %83 = math.tanh %82 : vector<1x128xf32>
    %c7_17 = arith.constant 7 : index
    %84 = memref.load %arg4[%c7_17] : memref<8xf32, #tpu.memory_space<smem>>
    %85 = vector.broadcast %84 : f32 to vector<1x128xf32>
    %86 = arith.mulf %83, %85 : vector<1x128xf32>
    %87 = arith.addf %76, %86 : vector<1x128xf32>
    %c0_18 = arith.constant 0 : index
    %c0_19 = arith.constant 0 : index
    %88 = vector.load %arg5[%c0_18, %c0_19] : memref<1x128xf32, #tpu.memory_space<vmem>>, vector<1x128xf32>
    tpu.vector_store %arg5[%c0_18, %c0_19], %87 {strides = array<i32>} : memref<1x128xf32, #tpu.memory_space<vmem>>, vector<1x128xf32>,
    return
  }
  func.func @transform_0(%arg0: i32) -> (i32, i32) {
    %c0_i32 = arith.constant 0 : i32
    %c0_i32_0 = arith.constant 0 : i32
    return %arg0, %c0_i32 : i32, i32
  }
  func.func @transform_1(%arg0: i32) -> i32 {
    %c0_i32 = arith.constant 0 : i32
    %c0_i32_0 = arith.constant 0 : i32
    return %c0_i32 : i32
  }
  func.func @transform_2(%arg0: i32) -> i32 {
    %c0_i32 = arith.constant 0 : i32
    %c0_i32_0 = arith.constant 0 : i32
    return %c0_i32 : i32
  }
  func.func @transform_3(%arg0: i32) -> i32 {
    %c0_i32 = arith.constant 0 : i32
    %c0_i32_0 = arith.constant 0 : i32
    return %c0_i32 : i32
  }
  func.func @transform_4(%arg0: i32) -> (i32, i32) {
    %c0_i32 = arith.constant 0 : i32
    %c0_i32_0 = arith.constant 0 : i32
    return %arg0, %c0_i32 : i32, i32
  }
}

</mosaic_0001>

<llo_original>
// kernel: two_nn_forward.1
$region0: #{two_nn_forward.1}
  #allocation0 [shape = 'u32[]', space=smem, size = 0x4, offset = 0x4, fixed_abs, tag = 'smem constant byte address 0x4 - core index']
  #allocation1 [shape = 'u32[72,128]{1,0:T(1,128)}', space=vmem, size = 0x9000, scoped, tag = 'internal scratch']
  %s0 = inlined_call_operand.vmem [shape: f32[1,128], index: 0, kind: input, shape index: {}]
  %s1 = inlined_call_operand.vmem [shape: f32[8], index: 1, kind: input, shape index: {}]
  %s2 = inlined_call_operand.vmem [shape: f32[8], index: 2, kind: input, shape index: {}]
  %s3 = inlined_call_operand.vmem [shape: f32[8], index: 3, kind: input, shape index: {}]
  %s4 = inlined_call_operand.vmem [shape: f32[1,128], index: 4, kind: output, shape index: {}]
  %s5 = sld [smem:[#allocation0]]
  $region38: #{two_nn_forward.1} parent=0
    _
  %s7 = ssub.s32 1, %s5
  %s8 = scalar_select 0, %s7, %s5
  $region1: #{two_nn_forward.1} parent=0
    #allocation2 [shape = 'u8[512]{0}', space=smem, size = 0x200, scoped, tag = 'input window, operand 1, single buffered']
    #allocation3 [shape = 's32[1]{0}', space=sflag, size = 0x4, scoped, tag = 'scoped memory for two_nn_forward.1']
    #allocation4 [shape = 'u8[512]{0}', space=smem, size = 0x200, scoped, tag = 'input window, operand 2, single buffered']
    #allocation5 [shape = 's32[1]{0}', space=sflag, size = 0x4, scoped, tag = 'scoped memory for two_nn_forward.1']
    #allocation6 [shape = 'u8[512]{0}', space=smem, size = 0x200, scoped, tag = 'input window, operand 3, single buffered']
    %9 = vsyncpa [#allocation3], 0
    %10 = vsyncpa [#allocation5], 0
    // Predicated region
    $region2: #{two_nn_forward.1} parent=1 // pred_check
      _
    $region3: #{two_nn_forward.1} parent=1 // pred_check_branch
      %12 = sbr.rel (0) target = $region5
    $region4: #{two_nn_forward.1} parent=1 // pred_region
      _
    $region5: #{two_nn_forward.1} parent=1 // pred_fallthru
      _
    // Predicated region
    $region6: #{two_nn_forward.1} parent=1 // pred_check
      _
    $region7: #{two_nn_forward.1} parent=1 // pred_check_branch
      %14 = sbr.rel (0) target = $region9
    $region8: #{two_nn_forward.1} parent=1 // pred_region
      %16 = vsyncadd [#allocation3], 0
      %s18 = sshll.u32 %s1, 4
      %s19 = int_to_ptr.vmem [resolvable:$true] %s18
      %21 = dma.vmem_to_smem %s19, 16, [#allocation2], [#allocation3]
    $region9: #{two_nn_forward.1} parent=1 // pred_fallthru
      _
    // Predicated region
    $region10: #{two_nn_forward.1} parent=1 // pred_check
      _
    $region11: #{two_nn_forward.1} parent=1 // pred_check_branch
      %23 = sbr.rel (0) target = $region13
    $region12: #{two_nn_forward.1} parent=1 // pred_region
      %25 = vsyncadd [#allocation5], 0
      %s27 = sshll.u32 %s2, 4
      %s28 = int_to_ptr.vmem [resolvable:$true] %s27
      %30 = dma.vmem_to_smem %s28, 16, [#allocation4], [#allocation5]
    $region13: #{two_nn_forward.1} parent=1 // pred_fallthru
      _
    // Predicated region
    $region14: #{two_nn_forward.1} parent=1 // pred_check
      _
    $region15: #{two_nn_forward.1} parent=1 // pred_check_branch
      %32 = sbr.rel (0) target = $region17
    $region16: #{two_nn_forward.1} parent=1 // pred_region
      %34 = vsyncadd [#allocation5], 0
      %s36 = sshll.u32 %s3, 4
      %s37 = int_to_ptr.vmem [resolvable:$true] %s36
      %39 = dma.vmem_to_smem %s37, 16, [#allocation6], [#allocation5]
    $region17: #{two_nn_forward.1} parent=1 // pred_fallthru
      _
    // Predicated region
    $region18: #{two_nn_forward.1} parent=1 // pred_check
      _
    $region19: #{two_nn_forward.1} parent=1 // pred_check_branch
      %41 = sbr.rel (0) target = $region21
    $region20: #{two_nn_forward.1} parent=1 // pred_region
      %43 = dma.done [#allocation3], 16
    $region21: #{two_nn_forward.1} parent=1 // pred_fallthru
      _
    // Predicated region
    $region22: #{two_nn_forward.1} parent=1 // pred_check
      _
    $region23: #{two_nn_forward.1} parent=1 // pred_check_branch
      %45 = sbr.rel (0) target = $region25
    $region24: #{two_nn_forward.1} parent=1 // pred_region
      %47 = dma.done [#allocation5], 16
    $region25: #{two_nn_forward.1} parent=1 // pred_fallthru
      _
    // Predicated region
    $region26: #{two_nn_forward.1} parent=1 // pred_check
      _
    $region27: #{two_nn_forward.1} parent=1 // pred_check_branch
      %49 = sbr.rel (0) target = $region29
    $region28: #{two_nn_forward.1} parent=1 // pred_region
      %51 = dma.done [#allocation5], 16
    $region29: #{two_nn_forward.1} parent=1 // pred_fallthru
      _
    %52 = sfence
    %v53 = vld [vmem:[%s0] sm:$0x1]
    %s54 = sld [smem:[#allocation2]]
    %v55 = vstv %s54
    %v56 = vmul.f32 %v53, %v55
    %s57 = sld [smem:[#allocation4]]
    %v58 = vstv %s57
    %v59 = vadd.f32 %v56, %v58
    %v60 = vtanh.pop %v59
    %s61 = sld [smem:[#allocation6]]
    %v62 = vstv %s61
    %v63 = vmul.f32 %v60, %v62
    %s64 = sld [smem:[#allocation2 + $0x1]]
    %v65 = vstv %s64
    %v66 = vmul.f32 %v53, %v65
    %s67 = sld [smem:[#allocation4 + $0x1]]
    %v68 = vstv %s67
    %v69 = vadd.f32 %v66, %v68
    %v70 = vtanh.pop %v69
    %s71 = sld [smem:[#allocation6 + $0x1]]
    %v72 = vstv %s71
    %v73 = vmul.f32 %v70, %v72
    %v74 = vadd.f32 %v63, %v73
    %s75 = sld [smem:[#allocation2 + $0x2]]
    %v76 = vstv %s75
    %v77 = vmul.f32 %v53, %v76
    %s78 = sld [smem:[#allocation4 + $0x2]]
    %v79 = vstv %s78
    %v80 = vadd.f32 %v77, %v79
    %v81 = vtanh.pop %v80
    %s82 = sld [smem:[#allocation6 + $0x2]]
    %v83 = vstv %s82
    %v84 = vmul.f32 %v81, %v83
    %v85 = vadd.f32 %v74, %v84
    %s86 = sld [smem:[#allocation2 + $0x3]]
    %v87 = vstv %s86
    %v88 = vmul.f32 %v53, %v87
    %s89 = sld [smem:[#allocation4 + $0x3]]
    %v90 = vstv %s89
    %v91 = vadd.f32 %v88, %v90
    %v92 = vtanh.pop %v91
    %s93 = sld [smem:[#allocation6 + $0x3]]
    %v94 = vstv %s93
    %v95 = vmul.f32 %v92, %v94
    %v96 = vadd.f32 %v85, %v95
    %s97 = sld [smem:[#allocation2 + $0x4]]
    %v98 = vstv %s97
    %v99 = vmul.f32 %v53, %v98
    %s100 = sld [smem:[#allocation4 + $0x4]]
    %v101 = vstv %s100
    %v102 = vadd.f32 %v99, %v101
    %v103 = vtanh.pop %v102
    %s104 = sld [smem:[#allocation6 + $0x4]]
    %v105 = vstv %s104
    %v106 = vmul.f32 %v103, %v105
    %v107 = vadd.f32 %v96, %v106
    %s108 = sld [smem:[#allocation2 + $0x5]]
    %v109 = vstv %s108
    %v110 = vmul.f32 %v53, %v109
    %s111 = sld [smem:[#allocation4 + $0x5]]
    %v112 = vstv %s111
    %v113 = vadd.f32 %v110, %v112
    %v114 = vtanh.pop %v113
    %s115 = sld [smem:[#allocation6 + $0x5]]
    %v116 = vstv %s115
    %v117 = vmul.f32 %v114, %v116
    %v118 = vadd.f32 %v107, %v117
    %s119 = sld [smem:[#allocation2 + $0x6]]
    %v120 = vstv %s119
    %v121 = vmul.f32 %v53, %v120
    %s122 = sld [smem:[#allocation4 + $0x6]]
    %v123 = vstv %s122
    %v124 = vadd.f32 %v121, %v123
    %v125 = vtanh.pop %v124
    %s126 = sld [smem:[#allocation6 + $0x6]]
    %v127 = vstv %s126
    %v128 = vmul.f32 %v125, %v127
    %v129 = vadd.f32 %v118, %v128
    %s130 = sld [smem:[#allocation2 + $0x7]]
    %v131 = vstv %s130
    %v132 = vmul.f32 %v53, %v131
    %s133 = sld [smem:[#allocation4 + $0x7]]
    %v134 = vstv %s133
    %v135 = vadd.f32 %v132, %v134
    %v136 = vtanh.pop %v135
    %s137 = sld [smem:[#allocation6 + $0x7]]
    %v138 = vstv %s137
    %v139 = vmul.f32 %v136, %v138
    %v140 = vadd.f32 %v129, %v139
    %141 = vst [vmem:[%s4] sm:$0x1] %v140
    // Predicated region
    $region30: #{two_nn_forward.1} parent=1 // pred_check
      _
    $region31: #{two_nn_forward.1} parent=1 // pred_check_branch
      %143 = sbr.rel (0) target = $region33
    $region32: #{two_nn_forward.1} parent=1 // pred_region
      _
    $region33: #{two_nn_forward.1} parent=1 // pred_fallthru
      _
    // Predicated region
    $region34: #{two_nn_forward.1} parent=1 // pred_check
      _
    $region35: #{two_nn_forward.1} parent=1 // pred_check_branch
      %145 = sbr.rel (0) target = $region37
    $region36: #{two_nn_forward.1} parent=1 // pred_region
      _
    $region37: #{two_nn_forward.1} parent=1 // pred_fallthru
      _
    %146 = vsyncpa [#allocation3], 1
    %147 = vsyncpa [#allocation5], 1

</llo_original>
